<compile_context>
chip_gen: v7x
topology: tpu7x:2x2x1
jax: 0.10.0
libtpu: 0.0.40
codegen_flags: <defaults>
</compile_context>

<pallas_src>
import jax
import jax.numpy as jnp
from jax.experimental import pallas as pl
from jax.experimental.pallas import tpu as pltpu


def _sublane_multiple(dtype) -> int:
    return {4: 8, 2: 16, 1: 32}.get(jnp.dtype(dtype).itemsize, 8)


def _local_linear3d_kernel(x_ref, w_ref, b_ref, o_ref):
    # x_ref: (L, tB, tF)   per-level / per-batch / per-feature values
    # w_ref: (L, tF)       per-feature weights, level-major (W[f, l] -> w[l, f])
    # b_ref: (1, tF)       per-feature bias
    # o_ref: (tB, tF)      output tile
    L, tB, tF = x_ref.shape

    # Hoist the (tiny) weight / bias loads out of the accumulation loops.
    w = w_ref[...].astype(jnp.float32)        # (L, tF)
    bias = b_ref[...].astype(jnp.float32)     # (1, tF)

    # Row-strip size: keep the f32 accumulator within ~16 vregs (64 KiB) so it
    # lives in registers across all L level updates instead of round-tripping
    # VMEM; align the strip to the dtype's sublane packing.
    sub = _sublane_multiple(x_ref.dtype)
    strip = min(tB, max(1, (64 * 1024) // (tF * 4)))
    if strip >= sub:
        strip = (strip // sub) * sub
    strip = max(1, min(strip, 256))

    def do_strip(r0, rows):
        # Level 0 folded with the bias init; levels 1..L-1 accumulate in vregs.
        acc = x_ref[0, r0:r0 + rows, :].astype(jnp.float32) * w[0:1, :] + bias
        for l in range(1, L):
            acc = acc + x_ref[l, r0:r0 + rows, :].astype(jnp.float32) * w[l:l + 1, :]
        o_ref[r0:r0 + rows, :] = acc.astype(o_ref.dtype)

    # tB and strip are static -> fully unrolled strip loop with static slices.
    for r0 in range(0, tB, strip):
        do_strip(r0, min(strip, tB - r0))


def local_linear3d(x, weight, bias, *, tile_b=512, tile_f=512):
    """out[b, f] = sum_l x[l, b, f] * weight[f, l] + bias[f].

    x: (n_levels, batch, n_features)
    weight: (n_features, n_levels)  -- stacked PyTorch nn.Linear(n_levels, 1) weights
    bias: (n_features,)
    """
    L, B, F = x.shape
    assert weight.shape == (F, L) and bias.shape == (F,)

    w_t = jnp.transpose(weight, (1, 0))      # (L, F): feature axis on lanes
    b2 = bias.reshape(1, F)

    itemsize = jnp.dtype(x.dtype).itemsize
    sub = _sublane_multiple(x.dtype)

    # Tile sizes: use the full dim when it fits in one tile (the (8,128) block
    # constraint then does not apply); otherwise hardware-aligned tiles with a
    # cdiv grid -> ragged last tiles, but never a wrapper-side pad of x.
    tF = F if F <= tile_f else max(128, (tile_f // 128) * 128)
    tB = B if B <= tile_b else max(sub, (tile_b // sub) * sub)

    nB = pl.cdiv(B, tB)
    nF = pl.cdiv(F, tF)

    # Larger extent on the leading ("parallel") axis -> both v7x TensorCores
    # always get work.
    if nB >= nF:
        grid = (nB, nF)
        x_spec = pl.BlockSpec((L, tB, tF), lambda i, j: (0, i, j))
        w_spec = pl.BlockSpec((L, tF), lambda i, j: (0, j))
        b_spec = pl.BlockSpec((1, tF), lambda i, j: (0, j))
        o_spec = pl.BlockSpec((tB, tF), lambda i, j: (i, j))
    else:
        grid = (nF, nB)
        x_spec = pl.BlockSpec((L, tB, tF), lambda j, i: (0, i, j))
        w_spec = pl.BlockSpec((L, tF), lambda j, i: (0, j))
        b_spec = pl.BlockSpec((1, tF), lambda j, i: (0, j))
        o_spec = pl.BlockSpec((tB, tF), lambda j, i: (i, j))

    # Double-buffered VMEM footprint; v5e's scoped default (16 MiB) is too
    # small for 512x512 f32 tiles, so set the limit explicitly. Cap well under
    # v7x's 64 MiB physical per-TC VMEM.
    w_itemsize = jnp.dtype(w_t.dtype).itemsize
    block_bytes = (L * tB * tF * itemsize       # x block
                   + tB * tF * itemsize         # out block
                   + L * tF * w_itemsize        # weight block
                   + tF * w_itemsize)           # bias block
    vmem_limit = int(min(max(4 * block_bytes, 32 << 20), 56 << 20))

    cost = pl.CostEstimate(
        flops=2 * L * B * F,
        transcendentals=0,
        bytes_accessed=(L * B * F + B * F) * itemsize + (F * L + F) * w_itemsize,
    )

    return pl.pallas_call(
        _local_linear3d_kernel,
        out_shape=jax.ShapeDtypeStruct((B, F), x.dtype),
        grid=grid,
        in_specs=[x_spec, w_spec, b_spec],
        out_specs=o_spec,
        compiler_params=pltpu.CompilerParams(
            dimension_semantics=("parallel", "parallel"),
            vmem_limit_bytes=vmem_limit,
        ),
        cost_estimate=cost,
    )(x, w_t, b2)


def _reference(x, weight, bias):
    return (jnp.einsum("lbf,fl->bf", x.astype(jnp.float32), weight.astype(jnp.float32))
            + bias.astype(jnp.float32)[None, :])


if __name__ == "__main__":
    key = jax.random.PRNGKey(0)

    # Case 1: small shapes consistent with the module (n_levels=8, batch=4, n_features=16).
    L, B, F = 8, 4, 16
    k1, k2, k3, key = jax.random.split(key, 4)
    x = jax.random.normal(k1, (L, B, F), dtype=jnp.float32)
    bound = 1.0 / (L ** 0.5)
    weight = jax.random.uniform(k2, (F, L), jnp.float32, -bound, bound)
    bias = jax.random.uniform(k3, (F,), jnp.float32, -bound, bound)

    out = jax.block_until_ready(local_linear3d(x, weight, bias))
    ref = _reference(x, weight, bias)
    assert out.shape == (B, F)
    assert jnp.allclose(out, ref, atol=1e-5, rtol=1e-5), "mismatch vs reference (case 1)"

    # Case 2: ragged multi-tile grid (exercises the no-pad cdiv path + strips).
    L2, B2, F2 = 5, 37, 300
    k1, k2, k3, key = jax.random.split(key, 4)
    x2 = jax.random.normal(k1, (L2, B2, F2), dtype=jnp.float32)
    bound2 = 1.0 / (L2 ** 0.5)
    w2 = jax.random.uniform(k2, (F2, L2), jnp.float32, -bound2, bound2)
    bb2 = jax.random.uniform(k3, (F2,), jnp.float32, -bound2, bound2)

    out2 = jax.block_until_ready(local_linear3d(x2, w2, bb2, tile_b=16, tile_f=128))
    ref2 = _reference(x2, w2, bb2)
    assert out2.shape == (B2, F2)
    assert jnp.allclose(out2, ref2, atol=1e-4, rtol=1e-4), "mismatch vs reference (case 2)"

    print("KERNEL_OK")
</pallas_src>

<mosaic_0001>
module attributes {stable_mosaic.version = 11 : i64} {
  func.func @_local_linear3d_kernel(%arg0: i32, %arg1: i32, %arg2: memref<8x4x16xf32, #tpu.memory_space<vmem>>, %arg3: memref<8x16xf32, #tpu.memory_space<vmem>>, %arg4: memref<1x16xf32, #tpu.memory_space<vmem>>, %arg5: memref<4x16xf32, #tpu.memory_space<vmem>>) attributes {dimension_semantics = [#tpu.dimension_semantics<parallel>, #tpu.dimension_semantics<parallel>], iteration_bounds = array<i64: 1, 1>, scalar_prefetch = 0 : i64, scratch_operands = 0 : i64, tpu.core_type = #tpu.core_type<tc>, window_params = [{transform_indices = @transform_0, window_bounds = array<i64: 8, 4, 16>}, {transform_indices = @transform_1, window_bounds = array<i64: 8, 16>}, {transform_indices = @transform_2, window_bounds = array<i64: 1, 16>}, {transform_indices = @transform_3, window_bounds = array<i64: 4, 16>}]} {
    %c0 = arith.constant 0 : index
    %c0_0 = arith.constant 0 : index
    %0 = vector.load %arg3[%c0, %c0_0] : memref<8x16xf32, #tpu.memory_space<vmem>>, vector<8x16xf32>
    %c0_1 = arith.constant 0 : index
    %c0_2 = arith.constant 0 : index
    %1 = vector.load %arg4[%c0_1, %c0_2] : memref<1x16xf32, #tpu.memory_space<vmem>>, vector<1x16xf32>
    %c0_3 = arith.constant 0 : index
    %c0_4 = arith.constant 0 : index
    %c0_5 = arith.constant 0 : index
    %2 = vector.load %arg2[%c0_3, %c0_4, %c0_5] : memref<8x4x16xf32, #tpu.memory_space<vmem>>, vector<1x4x16xf32>
    %3 = vector.shape_cast %2 : vector<1x4x16xf32> to vector<4x16xf32>
    %4 = vector.extract_strided_slice %0 {offsets = [0, 0], sizes = [1, 16], strides = [1, 1]} : vector<8x16xf32> to vector<1x16xf32>
    %5 = vector.broadcast %4 : vector<1x16xf32> to vector<4x16xf32>
    %6 = arith.mulf %3, %5 : vector<4x16xf32>
    %7 = vector.broadcast %1 : vector<1x16xf32> to vector<4x16xf32>
    %8 = arith.addf %6, %7 : vector<4x16xf32>
    %c1 = arith.constant 1 : index
    %c0_6 = arith.constant 0 : index
    %c0_7 = arith.constant 0 : index
    %9 = vector.load %arg2[%c1, %c0_6, %c0_7] : memref<8x4x16xf32, #tpu.memory_space<vmem>>, vector<1x4x16xf32>
    %10 = vector.shape_cast %9 : vector<1x4x16xf32> to vector<4x16xf32>
    %11 = vector.extract_strided_slice %0 {offsets = [1, 0], sizes = [1, 16], strides = [1, 1]} : vector<8x16xf32> to vector<1x16xf32>
    %12 = vector.broadcast %11 : vector<1x16xf32> to vector<4x16xf32>
    %13 = arith.mulf %10, %12 : vector<4x16xf32>
    %14 = arith.addf %8, %13 : vector<4x16xf32>
    %c2 = arith.constant 2 : index
    %c0_8 = arith.constant 0 : index
    %c0_9 = arith.constant 0 : index
    %15 = vector.load %arg2[%c2, %c0_8, %c0_9] : memref<8x4x16xf32, #tpu.memory_space<vmem>>, vector<1x4x16xf32>
    %16 = vector.shape_cast %15 : vector<1x4x16xf32> to vector<4x16xf32>
    %17 = vector.extract_strided_slice %0 {offsets = [2, 0], sizes = [1, 16], strides = [1, 1]} : vector<8x16xf32> to vector<1x16xf32>
    %18 = vector.broadcast %17 : vector<1x16xf32> to vector<4x16xf32>
    %19 = arith.mulf %16, %18 : vector<4x16xf32>
    %20 = arith.addf %14, %19 : vector<4x16xf32>
    %c3 = arith.constant 3 : index
    %c0_10 = arith.constant 0 : index
    %c0_11 = arith.constant 0 : index
    %21 = vector.load %arg2[%c3, %c0_10, %c0_11] : memref<8x4x16xf32, #tpu.memory_space<vmem>>, vector<1x4x16xf32>
    %22 = vector.shape_cast %21 : vector<1x4x16xf32> to vector<4x16xf32>
    %23 = vector.extract_strided_slice %0 {offsets = [3, 0], sizes = [1, 16], strides = [1, 1]} : vector<8x16xf32> to vector<1x16xf32>
    %24 = vector.broadcast %23 : vector<1x16xf32> to vector<4x16xf32>
    %25 = arith.mulf %22, %24 : vector<4x16xf32>
    %26 = arith.addf %20, %25 : vector<4x16xf32>
    %c4 = arith.constant 4 : index
    %c0_12 = arith.constant 0 : index
    %c0_13 = arith.constant 0 : index
    %27 = vector.load %arg2[%c4, %c0_12, %c0_13] : memref<8x4x16xf32, #tpu.memory_space<vmem>>, vector<1x4x16xf32>
    %28 = vector.shape_cast %27 : vector<1x4x16xf32> to vector<4x16xf32>
    %29 = vector.extract_strided_slice %0 {offsets = [4, 0], sizes = [1, 16], strides = [1, 1]} : vector<8x16xf32> to vector<1x16xf32>
    %30 = vector.broadcast %29 : vector<1x16xf32> to vector<4x16xf32>
    %31 = arith.mulf %28, %30 : vector<4x16xf32>
    %32 = arith.addf %26, %31 : vector<4x16xf32>
    %c5 = arith.constant 5 : index
    %c0_14 = arith.constant 0 : index
    %c0_15 = arith.constant 0 : index
    %33 = vector.load %arg2[%c5, %c0_14, %c0_15] : memref<8x4x16xf32, #tpu.memory_space<vmem>>, vector<1x4x16xf32>
    %34 = vector.shape_cast %33 : vector<1x4x16xf32> to vector<4x16xf32>
    %35 = vector.extract_strided_slice %0 {offsets = [5, 0], sizes = [1, 16], strides = [1, 1]} : vector<8x16xf32> to vector<1x16xf32>
    %36 = vector.broadcast %35 : vector<1x16xf32> to vector<4x16xf32>
    %37 = arith.mulf %34, %36 : vector<4x16xf32>
    %38 = arith.addf %32, %37 : vector<4x16xf32>
    %c6 = arith.constant 6 : index
    %c0_16 = arith.constant 0 : index
    %c0_17 = arith.constant 0 : index
    %39 = vector.load %arg2[%c6, %c0_16, %c0_17] : memref<8x4x16xf32, #tpu.memory_space<vmem>>, vector<1x4x16xf32>
    %40 = vector.shape_cast %39 : vector<1x4x16xf32> to vector<4x16xf32>
    %41 = vector.extract_strided_slice %0 {offsets = [6, 0], sizes = [1, 16], strides = [1, 1]} : vector<8x16xf32> to vector<1x16xf32>
    %42 = vector.broadcast %41 : vector<1x16xf32> to vector<4x16xf32>
    %43 = arith.mulf %40, %42 : vector<4x16xf32>
    %44 = arith.addf %38, %43 : vector<4x16xf32>
    %c7 = arith.constant 7 : index
    %c0_18 = arith.constant 0 : index
    %c0_19 = arith.constant 0 : index
    %45 = vector.load %arg2[%c7, %c0_18, %c0_19] : memref<8x4x16xf32, #tpu.memory_space<vmem>>, vector<1x4x16xf32>
    %46 = vector.shape_cast %45 : vector<1x4x16xf32> to vector<4x16xf32>
    %47 = vector.extract_strided_slice %0 {offsets = [7, 0], sizes = [1, 16], strides = [1, 1]} : vector<8x16xf32> to vector<1x16xf32>
    %48 = vector.broadcast %47 : vector<1x16xf32> to vector<4x16xf32>
    %49 = arith.mulf %46, %48 : vector<4x16xf32>
    %50 = arith.addf %44, %49 : vector<4x16xf32>
    %c0_20 = arith.constant 0 : index
    %c0_21 = arith.constant 0 : index
    %51 = vector.load %arg5[%c0_20, %c0_21] : memref<4x16xf32, #tpu.memory_space<vmem>>, vector<4x16xf32>
    tpu.vector_store %arg5[%c0_20, %c0_21], %50 {strides = array<i32>} : memref<4x16xf32, #tpu.memory_space<vmem>>, vector<4x16xf32>,
    return
  }
  func.func @transform_0(%arg0: i32, %arg1: i32) -> (i32, i32, i32) {
    %c0_i32 = arith.constant 0 : i32
    %c0_i32_0 = arith.constant 0 : i32
    return %c0_i32, %arg0, %arg1 : i32, i32, i32
  }
  func.func @transform_1(%arg0: i32, %arg1: i32) -> (i32, i32) {
    %c0_i32 = arith.constant 0 : i32
    %c0_i32_0 = arith.constant 0 : i32
    return %c0_i32, %arg1 : i32, i32
  }
  func.func @transform_2(%arg0: i32, %arg1: i32) -> (i32, i32) {
    %c0_i32 = arith.constant 0 : i32
    %c0_i32_0 = arith.constant 0 : i32
    return %c0_i32, %arg1 : i32, i32
  }
  func.func @transform_3(%arg0: i32, %arg1: i32) -> (i32, i32) {
    %c0_i32 = arith.constant 0 : i32
    return %arg0, %arg1 : i32, i32
  }
}

</mosaic_0001>

<llo_original>
// kernel: tpu_custom_call.1
$region0: #{tpu_custom_call.1}
  #allocation0 [shape = 'u32[]', space=smem, size = 0x4, offset = 0x4, fixed_abs, tag = 'smem constant byte address 0x4 - core index']
  #allocation1 [shape = 'u32[144,128]{1,0:T(1,128)}', space=vmem, size = 0x12000, scoped, tag = 'internal scratch']
  %s0 = inlined_call_operand.hbm [shape: f32[8,4,16], index: 0, kind: input, shape index: {}]
  %s1 = inlined_call_operand.hbm [shape: f32[8,16], index: 1, kind: input, shape index: {}]
  %s2 = inlined_call_operand.vmem [shape: f32[1,16], index: 2, kind: input, shape index: {}]
  %s3 = inlined_call_operand.hbm [shape: f32[4,16], index: 3, kind: output, shape index: {}]
  %s4 = sld [smem:[#allocation0]]
  $region30: #{tpu_custom_call.1} parent=0
    _
  %s6 = ssub.s32 1, %s4
  %s7 = scalar_select 0, %s6, %s4
  $region1: #{tpu_custom_call.1} parent=0
    #allocation2 [shape = 'u8[16384]{0}', space=vmem, size = 0x4000, scoped, tag = 'input window, operand 0, single buffered']
    #allocation3 [shape = 's32[1]{0}', space=sflag, size = 0x4, scoped, tag = 'scoped memory for tpu_custom_call.1']
    #allocation4 [shape = 's32[1]{0}', space=sflag, size = 0x4, scoped, tag = 'scoped memory for tpu_custom_call.1']
    #allocation5 [shape = 'u8[4096]{0}', space=vmem, size = 0x1000, scoped, tag = 'input window, operand 1, single buffered']
    #allocation6 [shape = 's32[1]{0}', space=sflag, size = 0x4, scoped, tag = 'scoped memory for tpu_custom_call.1']
    #allocation7 [shape = 'u8[2048]{0}', space=vmem, size = 0x800, scoped, tag = 'output window, operand 0, single buffered']
    %8 = vsyncpa [#allocation3], 0
    %9 = vsyncpa [#allocation6], 0
    %10 = vsyncpa [#allocation4], 0
    // Predicated region
    $region2: #{tpu_custom_call.1} parent=1 // pred_check
      _
    $region3: #{tpu_custom_call.1} parent=1 // pred_check_branch
      %12 = sbr.rel (0) target = $region5
    $region4: #{tpu_custom_call.1} parent=1 // pred_region
      %s14 = ssub.s32 512, 512
      %15 = vsyncadd [#allocation3], %s14
      %s16 = sshll.u32 [#allocation2], 4
      %s17 = int_to_ptr.vmem [resolvable:$true] %s16
      %22 = dma.hbm_to_vmem [thread:$0]  %s0, 512, %s17, [#allocation3], 64, 64, 4
    $region5: #{tpu_custom_call.1} parent=1 // pred_fallthru
      _
    // Predicated region
    $region6: #{tpu_custom_call.1} parent=1 // pred_check
      _
    $region7: #{tpu_custom_call.1} parent=1 // pred_check_branch
      %24 = sbr.rel (0) target = $region9
    $region8: #{tpu_custom_call.1} parent=1 // pred_region
      %s26 = ssub.s32 128, 128
      %27 = vsyncadd [#allocation6], %s26
      %s29 = sshll.u32 [#allocation5], 4
      %s30 = int_to_ptr.vmem [resolvable:$true] %s29
      %32 = dma.hbm_to_vmem [thread:$0]  %s1, 128, %s30, [#allocation6]
    $region9: #{tpu_custom_call.1} parent=1 // pred_fallthru
      _
    // Predicated region
    $region10: #{tpu_custom_call.1} parent=1 // pred_check
      _
    $region11: #{tpu_custom_call.1} parent=1 // pred_check_branch
      %34 = sbr.rel (0) target = $region13
    $region12: #{tpu_custom_call.1} parent=1 // pred_region
      _
    $region13: #{tpu_custom_call.1} parent=1 // pred_fallthru
      _
    // Predicated region
    $region14: #{tpu_custom_call.1} parent=1 // pred_check
      _
    $region15: #{tpu_custom_call.1} parent=1 // pred_check_branch
      %36 = sbr.rel (0) target = $region17
    $region16: #{tpu_custom_call.1} parent=1 // pred_region
      %37 = dma.done [#allocation3], 512
    $region17: #{tpu_custom_call.1} parent=1 // pred_fallthru
      _
    // Predicated region
    $region18: #{tpu_custom_call.1} parent=1 // pred_check
      _
    $region19: #{tpu_custom_call.1} parent=1 // pred_check_branch
      %39 = sbr.rel (0) target = $region21
    $region20: #{tpu_custom_call.1} parent=1 // pred_region
      %40 = dma.done [#allocation6], 128
    $region21: #{tpu_custom_call.1} parent=1 // pred_fallthru
      _
    %v41 = vld [vmem:[#allocation5] sm:$0xff]
    %v42 = vld [vmem:[%s2] sm:$0x1]
    %v43 = vld [vmem:[#allocation2] sm:$0xf]
    %v44 = vlaneseq
    %v45 = vshrl.u32 %v44, 7
    %v46 = vsub.s32 0, %v45
    %v47 = vrot.slane %v41, %v46
    %v48 = vmul.f32 %v43, %v47
    %v50 = vlaneseq
    %v51 = vshrl.u32 %v50, 7
    %v52 = vsub.s32 0, %v51
    %v53 = vrot.slane %v42, %v52
    %v55 = vadd.f32 %v48, %v53
    %s56 = scalar_lea.vmem [#allocation2], 4
    %v57 = vld [vmem:[%s56] sm:$0xf]
    %v58 = vlaneseq
    %v59 = vshrl.u32 %v58, 7
    %v60 = vsub.s32 1, %v59
    %v61 = vrot.slane %v41, %v60
    %v62 = vmul.f32 %v57, %v61
    %v63 = vadd.f32 %v55, %v62
    %s64 = scalar_lea.vmem [#allocation2], 8
    %v65 = vld [vmem:[%s64] sm:$0xf]
    %v66 = vlaneseq
    %v67 = vshrl.u32 %v66, 7
    %v68 = vsub.s32 2, %v67
    %v69 = vrot.slane %v41, %v68
    %v70 = vmul.f32 %v65, %v69
    %v71 = vadd.f32 %v63, %v70
    %s72 = scalar_lea.vmem [#allocation2], 12
    %v73 = vld [vmem:[%s72] sm:$0xf]
    %v74 = vlaneseq
    %v75 = vshrl.u32 %v74, 7
    %v76 = vsub.s32 3, %v75
    %v77 = vrot.slane %v41, %v76
    %v78 = vmul.f32 %v73, %v77
    %v79 = vadd.f32 %v71, %v78
    %s80 = scalar_lea.vmem [#allocation2], 16
    %v81 = vld [vmem:[%s80] sm:$0xf]
    %v82 = vlaneseq
    %v83 = vshrl.u32 %v82, 7
    %v84 = vsub.s32 4, %v83
    %v85 = vrot.slane %v41, %v84
    %v86 = vmul.f32 %v81, %v85
    %v87 = vadd.f32 %v79, %v86
    %s88 = scalar_lea.vmem [#allocation2], 20
    %v89 = vld [vmem:[%s88] sm:$0xf]
    %v90 = vlaneseq
    %v91 = vshrl.u32 %v90, 7
    %v92 = vsub.s32 5, %v91
    %v93 = vrot.slane %v41, %v92
    %v94 = vmul.f32 %v89, %v93
    %v95 = vadd.f32 %v87, %v94
    %s96 = scalar_lea.vmem [#allocation2], 24
    %v97 = vld [vmem:[%s96] sm:$0xf]
    %v98 = vlaneseq
    %v99 = vshrl.u32 %v98, 7
    %v100 = vsub.s32 6, %v99
    %v101 = vrot.slane %v41, %v100
    %v102 = vmul.f32 %v97, %v101
    %v103 = vadd.f32 %v95, %v102
    %s104 = scalar_lea.vmem [#allocation2], 28
    %v105 = vld [vmem:[%s104] sm:$0xf]
    %v106 = vlaneseq
    %v107 = vshrl.u32 %v106, 7
    %v108 = vsub.s32 7, %v107
    %v109 = vrot.slane %v41, %v108
    %v110 = vmul.f32 %v105, %v109
    %v111 = vadd.f32 %v103, %v110
    %vm112 = vcmask 125952
    %113 = vst.msk [vmem:[#allocation7] sm:$0xf] %vm112, %v111
    // Predicated region
    $region22: #{tpu_custom_call.1} parent=1 // pred_check
      _
    $region23: #{tpu_custom_call.1} parent=1 // pred_check_branch
      %115 = sbr.rel (0) target = $region25
    $region24: #{tpu_custom_call.1} parent=1 // pred_region
      %s117 = ssub.s32 64, 64
      %118 = vsyncadd [#allocation4], %s117
      %s120 = sshll.u32 [#allocation7], 4
      %s121 = int_to_ptr.vmem [resolvable:$true] %s120
      %123 = dma.vmem_to_hbm [thread:$0]  %s121, 64, %s3, [#allocation4]
    $region25: #{tpu_custom_call.1} parent=1 // pred_fallthru
      _
    // Predicated region
    $region26: #{tpu_custom_call.1} parent=1 // pred_check
      _
    $region27: #{tpu_custom_call.1} parent=1 // pred_check_branch
      %125 = sbr.rel (0) target = $region29
    $region28: #{tpu_custom_call.1} parent=1 // pred_region
      %126 = dma.done [#allocation4], 64
    $region29: #{tpu_custom_call.1} parent=1 // pred_fallthru
      _
    %127 = vsyncpa [#allocation3], 1
    %128 = vsyncpa [#allocation6], 1
    %129 = vsyncpa [#allocation4], 1

</llo_original>
